<compile_context>
chip_gen: v7x
topology: tpu7x:2x2x1
jax: 0.10.0
libtpu: 0.0.40
codegen_flags: <defaults>
</compile_context>

<pallas_src>
import math

import jax
import jax.numpy as jnp
from jax.experimental import pallas as pl
from jax.experimental.pallas import tpu as pltpu


def _round_up(a, b):
    return (a + b - 1) // b * b


def _vmem_capacity_bytes():
    """Physical VMEM of the local TPU (0 if unknown)."""
    try:
        info = pltpu.get_tpu_info()
        return int(getattr(info, "vmem_capacity_bytes", 0) or 0)
    except Exception:
        return 0


# ---------------------------------------------------------------------------
# Pallas kernel: tiled streamed contraction + root/bias init + tanh
# ---------------------------------------------------------------------------
def _score_kernel(a_ref, hvec_ref, rb_ref, score_ref, acc_ref):
    k = pl.program_id(1)

    @pl.when(k == 0)
    def _init():
        # accumulator starts at the fused root term + bias  (f32)
        acc_ref[...] = rb_ref[...]

    # A tile: (tm, tk) bf16 streamed from HBM; hvec: f32, VMEM-resident,
    # sliced along its (tiny) first axis.  bf16 * f32 promotes to f32, so the
    # accumulation keeps full f32 precision for hvec.
    hv = hvec_ref[pl.ds(k, 1), :]                      # (1, tk) f32
    prod = a_ref[...] * hv                             # (tm, tk) f32 (VPU)
    acc_ref[...] += jnp.sum(prod, axis=-1, keepdims=True)   # XLU lane reduce

    @pl.when(k == pl.num_programs(1) - 1)
    def _finalize():
        score_ref[...] = jnp.tanh(acc_ref[...])        # (tm, 1) f32


def _rgcn_scores_pallas(a_flat, hvec, root_bias, *, tm, tk, vmem_limit):
    n_pad, k_pad = a_flat.shape
    num_k = k_pad // tk
    grid = (n_pad // tm, num_k)          # reduction axis last ("arbitrary")
    return pl.pallas_call(
        _score_kernel,
        out_shape=jax.ShapeDtypeStruct((n_pad, 1), jnp.float32),
        grid_spec=pltpu.PrefetchScalarGridSpec(
            num_scalar_prefetch=0,
            grid=grid,
            in_specs=[
                pl.BlockSpec((tm, tk), lambda i, k: (i, k)),       # A tile (bf16)
                pl.BlockSpec((num_k, tk), lambda i, k: (0, 0)),    # hvec, resident f32
                pl.BlockSpec((tm, 1), lambda i, k: (i, 0)),        # root + bias (f32)
            ],
            out_specs=pl.BlockSpec((tm, 1), lambda i, k: (i, 0)),  # score
            scratch_shapes=[pltpu.VMEM((tm, 1), jnp.float32)],
        ),
        compiler_params=pltpu.CompilerParams(
            dimension_semantics=("parallel", "arbitrary"),
            vmem_limit_bytes=vmem_limit,
        ),
    )(a_flat, hvec, root_bias)


# ---------------------------------------------------------------------------
# Glue (plain JAX, eager)
# ---------------------------------------------------------------------------
def build_norm_adj_flat(edge_index, edge_type, n, n_pad, k_pad, num_relations,
                        dtype):
    """A_flat[i, r*n_pad + j] = 1/|N_r(i)| for every edge j->i of relation r
    (reproduces FastRGCNConv's default aggr='mean'), built in a single scatter
    pass: O(E) degree segment-sum, then one scatter-add into the bf16 buffer."""
    src, dst = edge_index[0], edge_index[1]
    deg = jnp.zeros((n, num_relations), jnp.float32).at[dst, edge_type].add(1.0)
    inv = 1.0 / jnp.maximum(deg, 1.0)
    vals = inv[dst, edge_type]                              # (E,)  1/|N_r(i)|
    cols = edge_type.astype(jnp.int32) * n_pad + src
    # TODO(synk): O(R*N^2) dense adjacency; very large graphs need a sparse/CSR
    #             gather kernel instead of densification.
    return jnp.zeros((n_pad, k_pad), dtype).at[dst, cols].add(vals.astype(dtype))


def rgcn_conv_scores(x, edge_index, edge_type, params, *,
                     tm=None, tk=None, adj_dtype=jnp.bfloat16):
    """FastRGCNConv(in_channels -> 1) + tanh scores via the Pallas kernel."""
    n, c = x.shape
    r = params["weight"].shape[0]

    # ---- generation-aware tile / scoped-VMEM selection ----------------------
    vmem_phys = _vmem_capacity_bytes()
    big_vmem = vmem_phys >= (100 << 20)                # v5e / v6e: 128 MiB VMEM
    limit_cap = (96 << 20) if big_vmem else (48 << 20)  # v7x: only 64 MiB per TC
    tm_default = 512
    tk_default = 4096 if big_vmem else 2048
    # TODO(synk): on v7x only, A_flat could be streamed as fp8 (validate that
    #             top-k ranking is unchanged) for another ~2x on the A stream.

    n_pad = _round_up(n, 128)                          # fixed pad, decoupled from tm
    if tm is None:
        tm = tm_default
        while tm > 8 and n_pad % tm != 0:
            tm //= 2
        if n_pad // tm < 2:                            # >=2 row tiles for v7x megacore
            tm = max(8, tm // 2)
    assert tm % 8 == 0 and n_pad % tm == 0, "tm must be a multiple of 8 dividing n_pad"

    k_flat = r * n_pad                                 # multiple of 128
    if tk is None:
        tk = min(tk_default, k_flat)
    assert tk % 128 == 0, "tk must be a multiple of 128 (lanes)"
    k_pad = _round_up(k_flat, tk)
    num_k = k_pad // tk

    # ---- tiny projections (MXU-starved: plain XLA, no Pallas) ----------------
    w = params["weight"][:, :, 0]                                     # (R, C)
    h = jnp.einsum("nc,rc->nr", x, w,
                   precision=jax.lax.Precision.HIGHEST)               # (N, R) f32
    rb = (jnp.dot(x, params["root"], precision=jax.lax.Precision.HIGHEST)
          + params["bias"][0, 0])                                     # (N, 1) f32

    # hvec[r*n_pad + j] = h[j, r], lane-major (num_k, tk), kept f32 for accuracy
    hmat = jnp.zeros((r, n_pad), jnp.float32).at[:, :n].set(h.T)
    hvec = (jnp.zeros((k_pad,), jnp.float32).at[:k_flat].set(hmat.reshape(-1))
            .reshape(num_k, tk))
    root_bias = jnp.zeros((n_pad, 1), jnp.float32).at[:n].set(rb)

    # single-pass bf16 normalized adjacency (built directly at padded shape)
    a_flat = build_norm_adj_flat(edge_index, edge_type, n, n_pad, k_pad, r,
                                 adj_dtype)

    # explicit scoped-VMEM budget (double-buffered A tiles, resident hvec,
    # lane-padded (tm,1) blocks, accumulator, f32 elementwise temporaries)
    itemsize = jnp.dtype(adj_dtype).itemsize
    est = (2 * tm * tk * itemsize                       # A double buffers
           + 2 * _round_up(num_k, 8) * tk * 4           # resident hvec (x2, safe)
           + 4 * tm * 128 * 4                           # rb + score blocks (padded)
           + tm * 128 * 4                               # accumulator scratch
           + 2 * tm * tk * 4)                           # f32 multiply temporaries
    vmem_limit = int(min(max(2 * est, 32 << 20), limit_cap))

    score_pad = _rgcn_scores_pallas(a_flat, hvec, root_bias,
                                    tm=tm, tk=tk, vmem_limit=vmem_limit)
    return score_pad[:n, 0]


def topk_perm(score, ratio, batch_size, nodes_per_graph):
    # equal-sized graphs: per-graph descending sort, keep ceil(ratio * n) nodes
    # NOTE: tie-breaking on exactly-equal scores may differ from torch.topk.
    k = int(math.ceil(ratio * nodes_per_graph))
    dense = score.reshape(batch_size, nodes_per_graph)
    order = jnp.argsort(-dense, axis=-1)[:, :k]
    offsets = (jnp.arange(batch_size, dtype=order.dtype) * nodes_per_graph)[:, None]
    return (order + offsets).reshape(-1)


def filter_adj(edge_index, edge_attr, perm, num_nodes):
    # TODO(synk): dynamic-shape boolean edge filtering has no static Pallas form;
    # done eagerly like torch_geometric.utils.filter_adj.
    remap = -jnp.ones((num_nodes,), jnp.int32)
    remap = remap.at[perm].set(jnp.arange(perm.shape[0], dtype=jnp.int32))
    row = remap[edge_index[0]]
    col = remap[edge_index[1]]
    keep = (row >= 0) & (col >= 0)
    row, col = row[keep], col[keep]
    edge_attr = edge_attr[keep] if edge_attr is not None else None
    return jnp.stack([row, col], axis=0), edge_attr


def rgcn_sag_pooling(x, edge_index, edge_type, batch, params, *,
                     ratio=0.5, multiplier=1.0, batch_size, nodes_per_graph,
                     tm=None, tk=None, adj_dtype=jnp.bfloat16):
    n = x.shape[0]
    score = rgcn_conv_scores(x, edge_index, edge_type, params,
                             tm=tm, tk=tk, adj_dtype=adj_dtype)
    perm = topk_perm(score, ratio, batch_size, nodes_per_graph)
    score_perm = jnp.take(score, perm)
    # x * score is deferred until after top-k: only the K surviving rows are
    # gathered and scaled (small K*C op, left to XLA).
    x_out = jnp.take(x, perm, axis=0) * score_perm[:, None]
    if multiplier != 1:
        x_out = multiplier * x_out
    batch_out = jnp.take(batch, perm, axis=0)
    edge_index_out, edge_attr_out = filter_adj(edge_index, edge_type, perm, n)
    return x_out, edge_index_out, edge_attr_out, batch_out, perm, score_perm


# ---------------------------------------------------------------------------
# Main
# ---------------------------------------------------------------------------
if __name__ == "__main__":
    B = 2                       # graphs in the batch
    nodes_per_graph = 64
    N = B * nodes_per_graph     # 128 nodes
    C = 32                      # in_channels
    R = 4                       # num_relations
    ratio = 0.5
    TM, TK = 64, 256            # small tiles so the toy problem runs a 2x2 grid

    key = jax.random.PRNGKey(0)
    kx, kw, kr, kt = jax.random.split(key, 4)

    x = jax.random.normal(kx, (N, C), dtype=jnp.float32)

    # ring edges (both directions) inside each graph
    src, dst = [], []
    for g in range(B):
        base = g * nodes_per_graph
        for j in range(nodes_per_graph):
            a, b = base + j, base + (j + 1) % nodes_per_graph
            src += [a, b]
            dst += [b, a]
    edge_index = jnp.array([src, dst], dtype=jnp.int32)     # (2, E)
    E = edge_index.shape[1]
    edge_type = jax.random.randint(kt, (E,), 0, R).astype(jnp.int32)
    batch = jnp.repeat(jnp.arange(B, dtype=jnp.int32), nodes_per_graph)

    # deterministic FastRGCNConv(in=C, out=1, R) parameters
    params = {
        "weight": jax.random.normal(kw, (R, C, 1), jnp.float32) / math.sqrt(C),
        "root": jax.random.normal(kr, (C, 1), jnp.float32) / math.sqrt(C),
        "bias": jnp.zeros((1, 1), jnp.float32),
    }

    out = rgcn_sag_pooling(x, edge_index, edge_type, batch, params,
                           ratio=ratio, multiplier=1.0,
                           batch_size=B, nodes_per_graph=nodes_per_graph,
                           tm=TM, tk=TK)
    x_out, ei_out, ea_out, batch_out, perm, score_perm = jax.block_until_ready(out)

    # scorer alone (same explicit tiles) + default auto-selected tiles
    score_k = jax.block_until_ready(
        rgcn_conv_scores(x, edge_index, edge_type, params, tm=TM, tk=TK))
    score_auto = jax.block_until_ready(
        rgcn_conv_scores(x, edge_index, edge_type, params))

    # --- pure-JAX f32 reference of the FastRGCNConv scorer -------------------
    counts = jnp.zeros((N, R, N), jnp.float32).at[
        edge_index[1], edge_type, edge_index[0]].add(1.0)
    deg = counts.sum(axis=2, keepdims=True)
    a3 = counts / jnp.maximum(deg, 1.0)                                 # (N, R, N)
    w = params["weight"][:, :, 0]                                        # (R, C)
    h_ref = jnp.einsum("nc,rc->nr", x, w,
                       precision=jax.lax.Precision.HIGHEST)              # (N, R)
    rb_ref = (jnp.dot(x, params["root"],
                      precision=jax.lax.Precision.HIGHEST)[:, 0]
              + params["bias"][0, 0])
    pre = jnp.einsum("irj,jr->i", a3, h_ref,
                     precision=jax.lax.Precision.HIGHEST) + rb_ref
    score_ref = jnp.tanh(pre)

    # scorer matches the f32 reference (A streamed in bf16 -> loose tolerance)
    assert jnp.allclose(score_k, score_ref, atol=5e-2), "score mismatch"
    # default tile selection gives the same scores as the explicit tiling
    assert jnp.allclose(score_auto, score_k, atol=1e-5), "tiling-dependent scores"
    # module outputs are consistent with the kernel scores
    assert jnp.allclose(score_perm, score_k[perm], atol=1e-6), "score[perm] mismatch"
    assert jnp.allclose(x_out, x[perm] * score_k[perm][:, None], atol=1e-5), \
        "pooled feature mismatch"

    # per-graph top-k selection invariants
    Ksel = perm.shape[0] // B
    dense = score_k.reshape(B, nodes_per_graph)
    kth = jnp.sort(dense, axis=-1)[:, ::-1][:, Ksel - 1]
    sel = score_k[perm].reshape(B, Ksel)
    assert bool(jnp.all(sel.min(axis=1) >= kth - 1e-6)), "top-k selection violated"
    assert bool(jnp.all(perm.reshape(B, Ksel) // nodes_per_graph
                        == jnp.arange(B)[:, None])), "perm crosses graph boundaries"

    assert batch_out.shape[0] == perm.shape[0]
    assert ei_out.shape[0] == 2 and ea_out.shape[0] == ei_out.shape[1]

    print("KERNEL_OK")
</pallas_src>

<mosaic_0001>
module attributes {stable_mosaic.version = 11 : i64} {
  func.func @_score_kernel(%arg0: i32, %arg1: i32, %arg2: memref<64x256xbf16, #tpu.memory_space<vmem>>, %arg3: memref<2x256xf32, #tpu.memory_space<vmem>>, %arg4: memref<64x1xf32, #tpu.memory_space<vmem>>, %arg5: memref<64x1xf32, #tpu.memory_space<vmem>>, %arg6: memref<64x1xf32, #tpu.memory_space<vmem>>) attributes {dimension_semantics = [#tpu.dimension_semantics<parallel>, #tpu.dimension_semantics<arbitrary>], iteration_bounds = array<i64: 2, 2>, scalar_prefetch = 0 : i64, scratch_operands = 1 : i64, tpu.core_type = #tpu.core_type<tc>, window_params = [{transform_indices = @transform_0, window_bounds = array<i64: 64, 256>}, {pipeline_mode = #tpu.pipeline_mode<synchronous>, transform_indices = @transform_1, window_bounds = array<i64: 2, 256>}, {transform_indices = @transform_2, window_bounds = array<i64: 64, 1>}, {transform_indices = @transform_3, window_bounds = array<i64: 64, 1>}]} {
    %c0_i32 = arith.constant 0 : i32
    %0 = arith.cmpi eq, %arg1, %c0_i32 : i32
    %1 = arith.extui %0 : i1 to i32
    %c0_i32_0 = arith.constant 0 : i32
    %2 = arith.cmpi ne, %1, %c0_i32_0 : i32
    scf.if %2 {
      %c0_8 = arith.constant 0 : index
      %c0_9 = arith.constant 0 : index
      %17 = vector.load %arg4[%c0_8, %c0_9] : memref<64x1xf32, #tpu.memory_space<vmem>>, vector<64x1xf32>
      %c0_10 = arith.constant 0 : index
      %c0_11 = arith.constant 0 : index
      %18 = vector.load %arg6[%c0_10, %c0_11] : memref<64x1xf32, #tpu.memory_space<vmem>>, vector<64x1xf32>
      tpu.vector_store %arg6[%c0_10, %c0_11], %17 {strides = array<i32>} : memref<64x1xf32, #tpu.memory_space<vmem>>, vector<64x1xf32>,
    } else {
    }
    %3 = arith.index_cast %arg1 : i32 to index
    %c0 = arith.constant 0 : index
    %4 = vector.load %arg3[%3, %c0] : memref<2x256xf32, #tpu.memory_space<vmem>>, vector<1x256xf32>
    %c0_1 = arith.constant 0 : index
    %c0_2 = arith.constant 0 : index
    %5 = vector.load %arg2[%c0_1, %c0_2] : memref<64x256xbf16, #tpu.memory_space<vmem>>, vector<64x256xbf16>
    %6 = arith.extf %5 : vector<64x256xbf16> to vector<64x256xf32>
    %7 = vector.broadcast %4 : vector<1x256xf32> to vector<64x256xf32>
    %8 = arith.mulf %6, %7 : vector<64x256xf32>
    %c0_3 = arith.constant 0 : index
    %c0_4 = arith.constant 0 : index
    %9 = vector.load %arg6[%c0_3, %c0_4] : memref<64x1xf32, #tpu.memory_space<vmem>>, vector<64x1xf32>
    %cst = arith.constant dense<0.000000e+00> : vector<64xf32>
    %10 = vector.multi_reduction <add>, %8, %cst [1] : vector<64x256xf32> to vector<64xf32>
    %11 = vector.shape_cast %10 : vector<64xf32> to vector<64x1xf32>
    %12 = arith.addf %9, %11 : vector<64x1xf32>
    %c0_5 = arith.constant 0 : index
    %c0_6 = arith.constant 0 : index
    %13 = vector.load %arg6[%c0_5, %c0_6] : memref<64x1xf32, #tpu.memory_space<vmem>>, vector<64x1xf32>
    tpu.vector_store %arg6[%c0_5, %c0_6], %12 {strides = array<i32>} : memref<64x1xf32, #tpu.memory_space<vmem>>, vector<64x1xf32>,
    %c1_i32 = arith.constant 1 : i32
    %14 = arith.cmpi eq, %arg1, %c1_i32 : i32
    %15 = arith.extui %14 : i1 to i32
    %c0_i32_7 = arith.constant 0 : i32
    %16 = arith.cmpi ne, %15, %c0_i32_7 : i32
    scf.if %16 {
      %c0_8 = arith.constant 0 : index
      %c0_9 = arith.constant 0 : index
      %17 = vector.load %arg6[%c0_8, %c0_9] : memref<64x1xf32, #tpu.memory_space<vmem>>, vector<64x1xf32>
      %18 = math.tanh %17 : vector<64x1xf32>
      %c0_10 = arith.constant 0 : index
      %c0_11 = arith.constant 0 : index
      %19 = vector.load %arg5[%c0_10, %c0_11] : memref<64x1xf32, #tpu.memory_space<vmem>>, vector<64x1xf32>
      tpu.vector_store %arg5[%c0_10, %c0_11], %18 {strides = array<i32>} : memref<64x1xf32, #tpu.memory_space<vmem>>, vector<64x1xf32>,
    } else {
    }
    return
  }
  func.func @transform_0(%arg0: i32, %arg1: i32) -> (i32, i32) {
    %c0_i32 = arith.constant 0 : i32
    return %arg0, %arg1 : i32, i32
  }
  func.func @transform_1(%arg0: i32, %arg1: i32) -> (i32, i32) {
    %c0_i32 = arith.constant 0 : i32
    %c0_i32_0 = arith.constant 0 : i32
    %c0_i32_1 = arith.constant 0 : i32
    return %c0_i32, %c0_i32_0 : i32, i32
  }
  func.func @transform_2(%arg0: i32, %arg1: i32) -> (i32, i32) {
    %c0_i32 = arith.constant 0 : i32
    %c0_i32_0 = arith.constant 0 : i32
    return %arg0, %c0_i32 : i32, i32
  }
  func.func @transform_3(%arg0: i32, %arg1: i32) -> (i32, i32) {
    %c0_i32 = arith.constant 0 : i32
    %c0_i32_0 = arith.constant 0 : i32
    return %arg0, %c0_i32 : i32, i32
  }
}

</mosaic_0001>

<llo_original>
// kernel: tpu_custom_call.1
$region0: #{tpu_custom_call.1}
  #allocation0 [shape = 'u32[]', space=smem, size = 0x4, offset = 0x4, fixed_abs, tag = 'smem constant byte address 0x4 - core index']
  #allocation1 [shape = 'u32[144,128]{1,0:T(1,128)}', space=vmem, size = 0x12000, scoped, tag = 'internal scratch']
  #allocation2 [shape = 'f32[64,1]{1,0:T(8,128)}', space=vmem, size = 0x8000, scoped, tag = 'scratch operand']
  %s0 = inlined_call_operand.hbm [shape: bf16[128,512], index: 0, kind: input, shape index: {}]
  %s1 = inlined_call_operand.vmem [shape: f32[2,256], index: 1, kind: input, shape index: {}]
  %s2 = inlined_call_operand.vmem [shape: f32[128,1], index: 2, kind: input, shape index: {}]
  %s3 = inlined_call_operand.vmem [shape: f32[128,1], index: 3, kind: output, shape index: {}]
  %s4 = sld [smem:[#allocation0]]
  $region57: #{tpu_custom_call.1} parent=0
    _
  %s6 = ssub.s32 1, %s4
  %s7 = scalar_select 0, %s6, %s4
  $region1: #{tpu_custom_call.1} parent=0
    #allocation3 [shape = 'u8[65536]{0}', space=vmem, size = 0x10000, scoped, tag = 'input window, operand 0']
    #allocation4 [shape = 's32[2]{0}', space=sflag, size = 0x8, scoped, tag = 'scoped memory for tpu_custom_call.1']
    %8 = vsyncpa [#allocation4], 0
    %s9 = scalar_lea.sflag [#allocation4], 1
    %10 = vsyncpa %s9, 0
    loop: start=0, step=1, limit=6
    $region2: #{tpu_custom_call.1} parent=1 // loop_pre_header
      _
    $region3: #{tpu_custom_call.1} parent=1 // loop_header
      %s12 = sphi 0, %s16
      %p13 = scmp.ge.s32.totalorder %s12, 6
      %s19 = sphi 0, %s31
      %s20 = sphi 0, %s27
      %s21 = sphi 0, %s19
      %s22 = sphi 0, %s20
      %s23 = sphi 0, %s21
      %s24 = sphi 0, %s22
      %s36 = sphi 0, %s38
      %s39 = sphi 0, %s36
      %s40 = sphi 0, %s39
      %s56 = sphi 0, %s40
      %s60 = sphi 0, %s60
      %s62 = sphi 0, %s60
      %s63 = sphi 0, %s62
      %s77 = sphi 0, %s63
      %s83 = sphi 0, %s85
      %s86 = sphi 0, %s83
      %s87 = sphi 0, %s86
      %s103 = sphi 0, %s87
      %s109 = sphi 0, %s111
      %s112 = sphi 0, %s109
      %s113 = sphi 0, %s112
      %s129 = sphi 0, %s113
    $region4: #{tpu_custom_call.1} parent=1 // loop_header_branch
      %15 = sbr.rel (%p13) target = $region8
    $region5: #{tpu_custom_call.1} parent=1 // loop_body
      %s17 = ssub.s32 %s12, 1
      %s18 = ssub.s32 %s12, 2
      %s25 = sadd.s32 1, %s20
      %p26 = scmp.ge.s32.totalorder %s25, 2
      %s27 = scalar_select %p26, 0, %s25
      %s28 = sadd.s32 1, %s19
      %s29 = scalar_select %p26, %s28, %s19
      %p30 = scmp.ge.s32.totalorder %s29, 2
      %s31 = scalar_select %p30, 0, %s29
      %s32 = ssub.s32 %s19, %s31
      %s33 = ssub.s32 %s20, %s27
      %s34 = sor.u32 %s32, %s33
      %p35 = scmp.eq.s32.totalorder %s34, 0
      %s37 = sadd.s32 %s36, 1
      %s38 = scalar_select %p35, %s36, %s37
      %p41 = pneg %p35
      %p42 = scmp.eq.s32.totalorder %s12, 3
      %p43 = por %p41, %p42
      %p44 = scmp.ne.s32.totalorder %s36, %s39
      %p45 = scmp.eq.s32.totalorder %s12, 0
      %p46 = por %p44, %p45
      %p47 = scmp.ne.s32.totalorder %s36, %s39
      %p48 = scmp.eq.s32.totalorder %s17, 3
      %p49 = por %p47, %p48
      %p50 = scmp.ne.s32.totalorder %s39, %s40
      %p51 = scmp.eq.s32.totalorder %s17, 0
      %p52 = por %p50, %p51
      %p53 = scmp.ne.s32.totalorder %s39, %s40
      %p54 = scmp.eq.s32.totalorder %s18, 3
      %p55 = por %p53, %p54
      %p57 = scmp.ne.s32.totalorder %s40, %s56
      %p58 = scmp.eq.s32.totalorder %s18, 0
      %p59 = por %p57, %p58
      %s61 = sadd.s32 %s60, 1
      %p64 = scmp.eq.s32.totalorder %s12, 3
      %p65 = scmp.ne.s32.totalorder %s60, %s62
      %p66 = scmp.eq.s32.totalorder %s12, 0
      %p67 = por %p65, %p66
      %p68 = scmp.ne.s32.totalorder %s60, %s62
      %p69 = scmp.eq.s32.totalorder %s17, 3
      %p70 = por %p68, %p69
      %p71 = scmp.ne.s32.totalorder %s62, %s63
      %p72 = scmp.eq.s32.totalorder %s17, 0
      %p73 = por %p71, %p72
      %p74 = scmp.ne.s32.totalorder %s62, %s63
      %p75 = scmp.eq.s32.totalorder %s18, 3
      %p76 = por %p74, %p75
      %p78 = scmp.ne.s32.totalorder %s63, %s77
      %p79 = scmp.eq.s32.totalorder %s18, 0
      %p80 = por %p78, %p79
      %s81 = ssub.s32 %s19, %s31
      %p82 = scmp.eq.s32.totalorder %s81, 0
      %s84 = sadd.s32 %s83, 1
      %s85 = scalar_select %p82, %s83, %s84
      %p88 = pneg %p82
      %p89 = scmp.eq.s32.totalorder %s12, 3
      %p90 = por %p88, %p89
      %p91 = scmp.ne.s32.totalorder %s83, %s86
      %p92 = scmp.eq.s32.totalorder %s12, 0
      %p93 = por %p91, %p92
      %p94 = scmp.ne.s32.totalorder %s83, %s86
      %p95 = scmp.eq.s32.totalorder %s17, 3
      %p96 = por %p94, %p95
      %p97 = scmp.ne.s32.totalorder %s86, %s87
      %p98 = scmp.eq.s32.totalorder %s17, 0
      %p99 = por %p97, %p98
      %p100 = scmp.ne.s32.totalorder %s86, %s87
      %p101 = scmp.eq.s32.totalorder %s18, 3
      %p102 = por %p100, %p101
      %p104 = scmp.ne.s32.totalorder %s87, %s103
      %p105 = scmp.eq.s32.totalorder %s18, 0
      %p106 = por %p104, %p105
      %s107 = ssub.s32 %s19, %s31
      %p108 = scmp.eq.s32.totalorder %s107, 0
      %s110 = sadd.s32 %s109, 1
      %s111 = scalar_select %p108, %s109, %s110
      %p114 = pneg %p108
      %p115 = scmp.eq.s32.totalorder %s12, 3
      %p116 = por %p114, %p115
      %p117 = scmp.ne.s32.totalorder %s109, %s112
      %p118 = scmp.eq.s32.totalorder %s12, 0
      %p119 = por %p117, %p118
      %p120 = scmp.ne.s32.totalorder %s109, %s112
      %p121 = scmp.eq.s32.totalorder %s17, 3
      %p122 = por %p120, %p121
      %p123 = scmp.ne.s32.totalorder %s112, %s113
      %p124 = scmp.eq.s32.totalorder %s17, 0
      %p125 = por %p123, %p124
      %p126 = scmp.ne.s32.totalorder %s112, %s113
      %p127 = scmp.eq.s32.totalorder %s18, 3
      %p128 = por %p126, %p127
      %p130 = scmp.ne.s32.totalorder %s113, %s129
      %p131 = scmp.eq.s32.totalorder %s18, 0
      %p132 = por %p130, %p131
      %p133 = scmp.le.s32.totalorder 1, %s12
      %p134 = scmp.lt.s32.totalorder %s12, 5
      %p135 = pnand %p133, %p134
      %p136 = pneg %p135
      // Predicated region
      $region9: #{tpu_custom_call.1} parent=5 // pred_check
        _
      $region10: #{tpu_custom_call.1} parent=5 // pred_check_branch
        %138 = sbr.rel (%p135) target = $region12
      $region11: #{tpu_custom_call.1} parent=5 // pred_region
        %s139 = ssub.s32 %s12, 1
        // Predicated region
        $region13: #{tpu_custom_call.1} parent=11 // pred_check
          %p140 = pneg %p73
        $region14: #{tpu_custom_call.1} parent=11 // pred_check_branch
          %142 = sbr.rel (%p140) target = $region16
        $region15: #{tpu_custom_call.1} parent=11 // pred_region
          _
        $region16: #{tpu_custom_call.1} parent=11 // pred_fallthru
          _
      $region12: #{tpu_custom_call.1} parent=5 // pred_fallthru
        _
      %p143 = scmp.lt.s32.totalorder %s12, 4
      // Predicated region
      $region17: #{tpu_custom_call.1} parent=5 // pred_check
        %p144 = pneg %p143
      $region18: #{tpu_custom_call.1} parent=5 // pred_check_branch
        %146 = sbr.rel (%p144) target = $region20
      $region19: #{tpu_custom_call.1} parent=5 // pred_region
        // Predicated region
        $region21: #{tpu_custom_call.1} parent=19 // pred_check
          %p147 = pneg %p46
        $region22: #{tpu_custom_call.1} parent=19 // pred_check_branch
          %149 = sbr.rel (%p147) target = $region24
        $region23: #{tpu_custom_call.1} parent=19 // pred_region
          %s150 = sand.u32 %s36, 1
          %s151 = scalar_lea.sflag [#allocation4], %s150
          %s152 = sand.u32 %s36, 1
          %s153 = smul.addr %s152, 64
          %s154 = scalar_lea.vmem [#allocation3], %s153
          %s155 = smul.u32 8, %s19
          %s156 = smul.u32 2, %s20
          %s158 = ssub.s32 1024, 1024
          %159 = vsyncadd %s151, %s158
          %s160 = smul.addr %s155, 4
          %s161 = sadd.s32 %s156, %s160
          %s162 = smul.addr %s161, 64
          %s163 = scalar_lea.hbm %s0, %s162
          %s164 = sshll.u32 %s154, 4
          %s165 = int_to_ptr.vmem [resolvable:$true] %s164
          %170 = dma.hbm_to_vmem [thread:$0]  %s163, 1024, %s165, %s151, 256, 128, 8
        $region24: #{tpu_custom_call.1} parent=19 // pred_fallthru
          _
        // Predicated region
        $region25: #{tpu_custom_call.1} parent=19 // pred_check
          %p171 = pneg %p93
        $region26: #{tpu_custom_call.1} parent=19 // pred_check_branch
          %173 = sbr.rel (%p171) target = $region28
        $region27: #{tpu_custom_call.1} parent=19 // pred_region
          %s174 = smul.u32 8, %s19
          %p175 = scmp.lt.s32.totalorder %s174, 15
          %s176 = scalar_select %p175, %s174, 15
          %s177 = smul.addr %s176, 8
          %s178 = scalar_lea.vmem %s2, %s177
          %s179 = smul.u32 8, %s19
        $region28: #{tpu_custom_call.1} parent=19 // pred_fallthru
          _
      $region20: #{tpu_custom_call.1} parent=5 // pred_fallthru
        _
      %p180 = scmp.le.s32.totalorder 1, %s12
      %p181 = scmp.lt.s32.totalorder %s12, 5
      %p182 = pnand %p180, %p181
      %p183 = pneg %p182
      // Predicated region
      $region29: #{tpu_custom_call.1} parent=5 // pred_check
        _
      $region30: #{tpu_custom_call.1} parent=5 // pred_check_branch
        %185 = sbr.rel (%p182) target = $region32
      $region31: #{tpu_custom_call.1} parent=5 // pred_region
        %s186 = ssub.s32 %s12, 1
        %s187 = sand.u32 %s39, 1
        %s188 = scalar_lea.sflag [#allocation4], %s187
        %s189 = sand.u32 %s39, 1
        %s190 = smul.addr %s189, 64
        %s191 = scalar_lea.vmem [#allocation3], %s190
        // Predicated region
        $region33: #{tpu_custom_call.1} parent=31 // pred_check
          %p192 = pneg %p52
        $region34: #{tpu_custom_call.1} parent=31 // pred_check_branch
          %194 = sbr.rel (%p192) target = $region36
        $region35: #{tpu_custom_call.1} parent=31 // pred_region
          %195 = dma.done %s188, 1024
        $region36: #{tpu_custom_call.1} parent=31 // pred_fallthru
          _
        %s196 = sand.u32 %s39, 1
        %s197 = scalar_lea.sflag [#allocation4], %s196
        %s198 = sand.u32 %s39, 1
        %s199 = smul.addr %s198, 64
        %s200 = scalar_lea.vmem [#allocation3], %s199
        %p201 = pneg %p52
        %p202 = pneg %p49
        %p203 = pneg %p73
        %p204 = pneg %p70
        %s205 = smul.u32 8, %s21
        %p206 = scmp.lt.s32.totalorder %s205, 15
        %s207 = scalar_select %p206, %s205, 15
        %s208 = smul.addr %s207, 8
        %s209 = scalar_lea.vmem %s2, %s208
        %p210 = pneg %p99
        %p211 = pneg %p96
        %p212 = pneg %p125
        %p213 = pneg %p122
        %s214 = smul.u32 8, %s21
        %p215 = scmp.lt.s32.totalorder %s214, 15
        %s216 = scalar_select %p215, %s214, 15
        %s217 = smul.addr %s216, 8
        %s218 = scalar_lea.vmem %s3, %s217
        %s219 = smul.u32 8, %s21
        %s220 = smul.u32 2, %s22
        %s221 = smul.u32 8, %s21
        %p222 = scmp.lt.s32.totalorder %s221, 15
        %s223 = scalar_select %p222, %s221, 15
        %s224 = smul.addr %s223, 8
        %s225 = scalar_lea.vmem %s2, %s224
        %s226 = smul.u32 8, %s21
        %s227 = smul.u32 8, %s21
        %p228 = scmp.lt.s32.totalorder %s227, 15
        %s229 = scalar_select %p228, %s227, 15
        %s230 = smul.addr %s229, 8
        %s231 = scalar_lea.vmem %s3, %s230
        %s232 = smul.u32 8, %s21
        %p233 = scmp.eq.s32.totalorder %s22, 0
        // Predicated region
        $region37: #{tpu_custom_call.1} parent=31 // pred_check
          %p234 = pneg %p233
        $region38: #{tpu_custom_call.1} parent=31 // pred_check_branch
          %236 = sbr.rel (%p234) target = $region40
        $region39: #{tpu_custom_call.1} parent=31 // pred_region
          %v237 = vld [vmem:[%s225] sm:$0xff]
          %v238 = vld [vmem:[%s225 + $0x8] sm:$0xff]
          %v239 = vld [vmem:[%s225 + $0x10] sm:$0xff]
          %v240 = vld [vmem:[%s225 + $0x18] sm:$0xff]
          %v241 = vld [vmem:[%s225 + $0x20] sm:$0xff]
          %v242 = vld [vmem:[%s225 + $0x28] sm:$0xff]
          %v243 = vld [vmem:[%s225 + $0x30] sm:$0xff]
          %v244 = vld [vmem:[%s225 + $0x38] sm:$0xff]
          %vm245 = vcmask 7168
          %246 = vst.msk [vmem:[#allocation2] sm:$0xff] %vm245, %v237
          %247 = vst.msk [vmem:[#allocation2 + $0x8] sm:$0xff] %vm245, %v238
          %248 = vst.msk [vmem:[#allocation2 + $0x10] sm:$0xff] %vm245, %v239
          %249 = vst.msk [vmem:[#allocation2 + $0x18] sm:$0xff] %vm245, %v240
          %250 = vst.msk [vmem:[#allocation2 + $0x20] sm:$0xff] %vm245, %v241
          %251 = vst.msk [vmem:[#allocation2 + $0x28] sm:$0xff] %vm245, %v242
          %252 = vst.msk [vmem:[#allocation2 + $0x30] sm:$0xff] %vm245, %v243
          %253 = vst.msk [vmem:[#allocation2 + $0x38] sm:$0xff] %vm245, %v244
        $region40: #{tpu_custom_call.1} parent=31 // pred_fallthru
          _
        %s254 = sshra.s32 %s22, 1
        %s255 = sand.u32 %s22, 1
        %s256 = sshra.s32 %s22, 1
        %s257 = sand.u32 %s22, 1
        %s258 = smul.u32 %s254, 2
        %s259 = smul.u32 %s258, 2
        %s260 = sadd.s32 %s259, %s257
        %s261 = scalar_lea.vmem %s1, %s260
        %v262 = vld [vmem:[%s261] ss:$2 sm:$0x3]
        %v263 = vld [vmem:[%s191] sm:$0xff]
        %v264 = vld [vmem:[%s191 + $0x8] sm:$0xff]
        %v265 = vld [vmem:[%s191 + $0x10] sm:$0xff]
        %v266 = vld [vmem:[%s191 + $0x18] sm:$0xff]
        %v267 = vld [vmem:[%s191 + $0x20] sm:$0xff]
        %v268 = vld [vmem:[%s191 + $0x28] sm:$0xff]
        %v269 = vld [vmem:[%s191 + $0x30] sm:$0xff]
        %v270 = vld [vmem:[%s191 + $0x38] sm:$0xff]
        %v271 = vunpack.c.l.bf16 %v263
        %v272 = vunpack.c.h.bf16 %v263
        %v273 = vunpack.c.l.bf16 %v264
        %v274 = vunpack.c.h.bf16 %v264
        %v275 = vunpack.c.l.bf16 %v265
        %v276 = vunpack.c.h.bf16 %v265
        %v277 = vunpack.c.l.bf16 %v266
        %v278 = vunpack.c.h.bf16 %v266
        %v279 = vunpack.c.l.bf16 %v267
        %v280 = vunpack.c.h.bf16 %v267
        %v281 = vunpack.c.l.bf16 %v268
        %v282 = vunpack.c.h.bf16 %v268
        %v283 = vunpack.c.l.bf16 %v269
        %v284 = vunpack.c.h.bf16 %v269
        %v285 = vunpack.c.l.bf16 %v270
        %v286 = vunpack.c.h.bf16 %v270
        %v288 = vlaneseq
        %v289 = vshrl.u32 %v288, 7
        %v290 = vsub.s32 0, %v289
        %v291 = vrot.slane %v262, %v290
        %v292 = vlaneseq
        %v293 = vshrl.u32 %v292, 7
        %v294 = vsub.s32 1, %v293
        %v295 = vrot.slane %v262, %v294
        %v298 = vmul.f32 %v271, %v291
        %v299 = vmul.f32 %v272, %v295
        %v300 = vmul.f32 %v273, %v291
        %v301 = vmul.f32 %v274, %v295
        %v302 = vmul.f32 %v275, %v291
        %v303 = vmul.f32 %v276, %v295
        %v304 = vmul.f32 %v277, %v291
        %v305 = vmul.f32 %v278, %v295
        %v306 = vmul.f32 %v279, %v291
        %v307 = vmul.f32 %v280, %v295
        %v308 = vmul.f32 %v281, %v291
        %v309 = vmul.f32 %v282, %v295
        %v310 = vmul.f32 %v283, %v291
        %v311 = vmul.f32 %v284, %v295
        %v312 = vmul.f32 %v285, %v291
        %v313 = vmul.f32 %v286, %v295
        %v314 = vld [vmem:[#allocation2] sm:$0xff]
        %v315 = vld [vmem:[#allocation2 + $0x8] sm:$0xff]
        %v316 = vld [vmem:[#allocation2 + $0x10] sm:$0xff]
        %v317 = vld [vmem:[#allocation2 + $0x18] sm:$0xff]
        %v318 = vld [vmem:[#allocation2 + $0x20] sm:$0xff]
        %v319 = vld [vmem:[#allocation2 + $0x28] sm:$0xff]
        %v320 = vld [vmem:[#allocation2 + $0x30] sm:$0xff]
        %v321 = vld [vmem:[#allocation2 + $0x38] sm:$0xff]
        %v322 = vadd.f32 %v298, %v299
        %323 = vadd.xlane.f32.xlu0 %v322
        %v324 = vpop.xlane.xlu0 %323
        %v325 = vadd.f32 %v300, %v301
        %326 = vadd.xlane.f32.xlu0 %v325
        %v327 = vpop.xlane.xlu0 %326
        %v328 = vadd.f32 %v302, %v303
        %329 = vadd.xlane.f32.xlu0 %v328
        %v330 = vpop.xlane.xlu0 %329
        %v331 = vadd.f32 %v304, %v305
        %332 = vadd.xlane.f32.xlu0 %v331
        %v333 = vpop.xlane.xlu0 %332
        %v334 = vadd.f32 %v306, %v307
        %335 = vadd.xlane.f32.xlu0 %v334
        %v336 = vpop.xlane.xlu0 %335
        %v337 = vadd.f32 %v308, %v309
        %338 = vadd.xlane.f32.xlu0 %v337
        %v339 = vpop.xlane.xlu0 %338
        %v340 = vadd.f32 %v310, %v311
        %341 = vadd.xlane.f32.xlu0 %v340
        %v342 = vpop.xlane.xlu0 %341
        %v343 = vadd.f32 %v312, %v313
        %344 = vadd.xlane.f32.xlu0 %v343
        %v345 = vpop.xlane.xlu0 %344
        %v346 = vadd.f32 %v314, %v324
        %v347 = vadd.f32 %v315, %v327
        %v348 = vadd.f32 %v316, %v330
        %v349 = vadd.f32 %v317, %v333
        %v350 = vadd.f32 %v318, %v336
        %v351 = vadd.f32 %v319, %v339
        %v352 = vadd.f32 %v320, %v342
        %v353 = vadd.f32 %v321, %v345
        %vm354 = vcmask 7168
        %355 = vst.msk [vmem:[#allocation2] sm:$0xff] %vm354, %v346
        %356 = vst.msk [vmem:[#allocation2 + $0x8] sm:$0xff] %vm354, %v347
        %357 = vst.msk [vmem:[#allocation2 + $0x10] sm:$0xff] %vm354, %v348
        %358 = vst.msk [vmem:[#allocation2 + $0x18] sm:$0xff] %vm354, %v349
        %359 = vst.msk [vmem:[#allocation2 + $0x20] sm:$0xff] %vm354, %v350
        %360 = vst.msk [vmem:[#allocation2 + $0x28] sm:$0xff] %vm354, %v351
        %361 = vst.msk [vmem:[#allocation2 + $0x30] sm:$0xff] %vm354, %v352
        %362 = vst.msk [vmem:[#allocation2 + $0x38] sm:$0xff] %vm354, %v353
        %p363 = scmp.eq.s32.totalorder %s22, 1
        // Predicated region
        $region41: #{tpu_custom_call.1} parent=31 // pred_check
          %p364 = pneg %p363
        $region42: #{tpu_custom_call.1} parent=31 // pred_check_branch
          %366 = sbr.rel (%p364) target = $region44
        $region43: #{tpu_custom_call.1} parent=31 // pred_region
          %v367 = vld [vmem:[#allocation2] sm:$0xff]
          %v368 = vld [vmem:[#allocation2 + $0x8] sm:$0xff]
          %v369 = vld [vmem:[#allocation2 + $0x10] sm:$0xff]
          %v370 = vld [vmem:[#allocation2 + $0x18] sm:$0xff]
          %v371 = vld [vmem:[#allocation2 + $0x20] sm:$0xff]
          %v372 = vld [vmem:[#allocation2 + $0x28] sm:$0xff]
          %v373 = vld [vmem:[#allocation2 + $0x30] sm:$0xff]
          %v374 = vld [vmem:[#allocation2 + $0x38] sm:$0xff]
          %v375 = vtanh.pop %v367
          %v376 = vtanh.pop %v368
          %v377 = vtanh.pop %v369
          %v378 = vtanh.pop %v370
          %v379 = vtanh.pop %v371
          %v380 = vtanh.pop %v372
          %v381 = vtanh.pop %v373
          %v382 = vtanh.pop %v374
          %383 = vst.msk [vmem:[%s231] sm:$0xff] %vm354, %v375
          %384 = vst.msk [vmem:[%s231 + $0x8] sm:$0xff] %vm354, %v376
          %385 = vst.msk [vmem:[%s231 + $0x10] sm:$0xff] %vm354, %v377
          %386 = vst.msk [vmem:[%s231 + $0x18] sm:$0xff] %vm354, %v378
          %387 = vst.msk [vmem:[%s231 + $0x20] sm:$0xff] %vm354, %v379
          %388 = vst.msk [vmem:[%s231 + $0x28] sm:$0xff] %vm354, %v380
          %389 = vst.msk [vmem:[%s231 + $0x30] sm:$0xff] %vm354, %v381
          %390 = vst.msk [vmem:[%s231 + $0x38] sm:$0xff] %vm354, %v382
        $region44: #{tpu_custom_call.1} parent=31 // pred_fallthru
          _
        %s391 = smul.u32 8, %s21
        %p392 = scmp.lt.s32.totalorder %s391, 15
        %s393 = scalar_select %p392, %s391, 15
        %s394 = smul.addr %s393, 8
        %s395 = scalar_lea.vmem %s3, %s394
        // Predicated region
        $region45: #{tpu_custom_call.1} parent=31 // pred_check
          %p396 = pneg %p122
        $region46: #{tpu_custom_call.1} parent=31 // pred_check_branch
          %398 = sbr.rel (%p396) target = $region48
        $region47: #{tpu_custom_call.1} parent=31 // pred_region
          %s399 = smul.u32 8, %s21
        $region48: #{tpu_custom_call.1} parent=31 // pred_fallthru
          _
      $region32: #{tpu_custom_call.1} parent=5 // pred_fallthru
        _
      %p400 = scmp.le.s32.totalorder 2, %s12
      // Predicated region
      $region49: #{tpu_custom_call.1} parent=5 // pred_check
        %p401 = pneg %p400
      $region50: #{tpu_custom_call.1} parent=5 // pred_check_branch
        %403 = sbr.rel (%p401) target = $region52
      $region51: #{tpu_custom_call.1} parent=5 // pred_region
        %s404 = ssub.s32 %s12, 2
        // Predicated region
        $region53: #{tpu_custom_call.1} parent=51 // pred_check
          %p405 = pneg %p128
        $region54: #{tpu_custom_call.1} parent=51 // pred_check_branch
          %407 = sbr.rel (%p405) target = $region56
        $region55: #{tpu_custom_call.1} parent=51 // pred_region
          %s408 = smul.u32 8, %s23
          %p409 = scmp.lt.s32.totalorder %s408, 15
          %s410 = scalar_select %p409, %s408, 15
          %s411 = smul.addr %s410, 8
          %s412 = scalar_lea.vmem %s3, %s411
        $region56: #{tpu_custom_call.1} parent=51 // pred_fallthru
          _
      $region52: #{tpu_custom_call.1} parent=5 // pred_fallthru
        _
    $region6: #{tpu_custom_call.1} parent=1 // loop_footer
      %s16 = sadd.s32 1, %s12
    $region7: #{tpu_custom_call.1} parent=1 // loop_footer_branch
      %11 = sbr.rel target = $region3
    $region8: #{tpu_custom_call.1} parent=1 // loop_exit
      _
    %413 = vsyncpa [#allocation4], 1
    %s414 = scalar_lea.sflag [#allocation4], 1
    %415 = vsyncpa %s414, 1

</llo_original>
